<compile_context>
chip_gen: v7x
topology: tpu7x:2x2x1
jax: 0.10.0
libtpu: 0.0.40
codegen_flags: <defaults>
</compile_context>

<pallas_src>
import functools

import jax
import jax.numpy as jnp
from jax.experimental import pallas as pl
from jax.experimental.pallas import tpu as pltpu

LANE = 128
SUB = 8


def _round_up(x, m):
    return ((x + m - 1) // m) * m


def char_rnn_kernel(tok_ref, table_ref, whh_ref, bh_ref, wfc_ref, bfc_ref,
                    out_ref, u_ref, hs_ref, h_ref, *,
                    t_chunk, batch_tile, unroll):
    """One (batch_tile, t_chunk) block of the RNN.

    tok_ref  : (t_chunk*batch_tile, 1) int32   tokens, time-major rows
    table_ref: (V_pad, H_pad)                  fused  emb @ W_ih
    whh_ref  : (H_pad, H_pad)
    bh_ref   : (1, H_pad) f32                  b_ih + b_hh
    wfc_ref  : (H_pad, V_pad)
    bfc_ref  : (1, V_pad) f32
    out_ref  : (t_chunk*batch_tile, V_pad) f32 logits
    u_ref    : scratch, pre-activations (f32)
    hs_ref   : scratch, stacked hidden states (compute dtype)
    h_ref    : scratch, hidden carry across time chunks (f32)
    """
    rows = t_chunk * batch_tile
    cdtype = table_ref.dtype
    v_pad = table_ref.shape[0]

    # Reset the hidden-state carry at the start of each batch tile's sweep.
    @pl.when(pl.program_id(1) == 0)
    def _():
        h_ref[...] = jnp.zeros_like(h_ref)

    # ---- Prologue: fused embedding + input projection for the whole chunk.
    # Gather rows of `table` with a one-hot MXU matmul (vocab is small), so
    # tokens are the only activation bytes coming over HBM.
    tok = tok_ref[...]                                            # (rows, 1)
    vocab_iota = jax.lax.broadcasted_iota(jnp.int32, (rows, v_pad), 1)
    onehot = jnp.where(vocab_iota == tok, 1.0, 0.0).astype(cdtype)
    u_ref[...] = (
        jnp.dot(onehot, table_ref[...], preferred_element_type=jnp.float32)
        + bh_ref[...]
    )

    # ---- Serial recurrence: only h @ W_hh sits on the dependent path.
    whh = whh_ref[...]

    def step(t, h):
        row = pl.multiple_of(t * batch_tile, batch_tile)
        u_t = u_ref[pl.ds(row, batch_tile), :]
        h_new = jnp.tanh(
            u_t + jnp.dot(h.astype(cdtype), whh,
                          preferred_element_type=jnp.float32))
        hs_ref[pl.ds(row, batch_tile), :] = h_new.astype(hs_ref.dtype)
        return h_new

    h_final = jax.lax.fori_loop(0, t_chunk, step, h_ref[...], unroll=unroll)
    h_ref[...] = h_final   # carry into the next time chunk

    # ---- Epilogue: batched output projection, single lane-dense store.
    out_ref[...] = (
        jnp.dot(hs_ref[...], wfc_ref[...], preferred_element_type=jnp.float32)
        + bfc_ref[...]
    )


def char_rnn_forward(tokens, params, *, compute_dtype=jnp.bfloat16):
    """tokens: int32 (B, T). Returns float32 logits (B, T, V).

    compute_dtype: dtype fed to the MXU for weights / matmul LHS.  bfloat16
    gives ~3x MXU throughput on v6e/v7x; float32 reproduces the reference
    recurrence to ~1e-5.
    """
    emb = params["embedding"]            # (V, E)
    w_ih = params["w_ih"]                # (E, H)
    w_hh = params["w_hh"]                # (H, H)
    b_h = params["b_h"]                  # (1, H)  (= b_ih + b_hh)
    w_fc = params["w_fc"]                # (H, V)
    b_fc = params["b_fc"]                # (1, V)

    B, T = tokens.shape
    V, _E = emb.shape
    H = w_hh.shape[0]

    H_pad = _round_up(H, LANE)
    V_pad = _round_up(V, LANE)

    # Batch padding and megacore batch-tile split: use 2 tiles when the batch
    # is big enough for each TensorCore to get at least one (8,128) tile.
    if B > SUB:
        B_pad = _round_up(B, 2 * SUB)
        nbt = 2
    else:
        B_pad = SUB
        nbt = 1
    B_tile = B_pad // nbt

    # ---- Fold embedding + input projection into one tiny (V, H) table.
    table = jnp.dot(emb, w_ih, precision=jax.lax.Precision.HIGHEST)
    table_p = jnp.pad(table, ((0, V_pad - V), (0, H_pad - H))).astype(compute_dtype)
    w_hh_p = jnp.pad(w_hh, ((0, H_pad - H), (0, H_pad - H))).astype(compute_dtype)
    w_fc_p = jnp.pad(w_fc, ((0, H_pad - H), (0, V_pad - V))).astype(compute_dtype)
    b_h_p = jnp.pad(b_h, ((0, 0), (0, H_pad - H))).astype(jnp.float32)
    b_fc_p = jnp.pad(b_fc, ((0, 0), (0, V_pad - V))).astype(jnp.float32)

    # ---- Pick the time-chunk from a VMEM budget (safe for v5e's 16 MiB
    # default scoped limit and v7x's 64 MiB physical VMEM), but >= 64 steps
    # when T allows so per-step pipeline overhead amortizes.
    csize = jnp.dtype(compute_dtype).itemsize
    bytes_per_step = B_tile * (
        2 * V_pad * 4          # logits block (double-buffered)
        + H_pad * 4            # u scratch (f32)
        + H_pad * csize        # hs scratch
        + 2 * LANE * 4         # token block, lane-padded int32 (double-buffered)
    )
    budget = 8 * 1024 * 1024
    t_chunk = max(1, min(T, 128, budget // bytes_per_step))
    T_pad = _round_up(T, t_chunk)
    n_tc = T_pad // t_chunk
    rows = t_chunk * B_tile

    # ---- Token relayout (tiny int32 glue): (B, T) -> (nbt, T_pad*B_tile, 1),
    # rows ordered time-major within each batch tile.
    tok = jnp.pad(tokens.astype(jnp.int32),
                  ((0, B_pad - B), (0, T_pad - T)))        # (B_pad, T_pad)
    tok = tok.reshape(nbt, B_tile, T_pad)
    tok = jnp.transpose(tok, (0, 2, 1))                    # (nbt, T_pad, B_tile)
    tok = tok.reshape(nbt, T_pad * B_tile, 1)

    # ---- VMEM budget estimate -> explicit limit (generous but bounded).
    weights_bytes = 2 * (V_pad * H_pad + H_pad * H_pad + H_pad * V_pad) * csize
    vmem_est = (
        2 * rows * LANE * 4            # tokens (lane-padded), double-buffered
        + 2 * rows * V_pad * 4         # out, double-buffered
        + rows * H_pad * 4             # u
        + rows * H_pad * csize         # hs
        + B_tile * H_pad * 4           # h carry
        + weights_bytes
        + 2 * SUB * (H_pad + V_pad) * 4
    )
    vmem_limit = int(min(max(2 * vmem_est + (4 << 20), 32 << 20), 64 << 20))

    kernel = functools.partial(
        char_rnn_kernel,
        t_chunk=t_chunk,
        batch_tile=B_tile,
        unroll=min(8, t_chunk),
    )

    out = pl.pallas_call(
        kernel,
        out_shape=jax.ShapeDtypeStruct((nbt, T_pad * B_tile, V_pad),
                                       jnp.float32),
        grid_spec=pltpu.PrefetchScalarGridSpec(
            num_scalar_prefetch=0,
            grid=(nbt, n_tc),
            in_specs=[
                pl.BlockSpec((None, rows, 1), lambda bi, ti: (bi, ti, 0)),
                pl.BlockSpec((V_pad, H_pad), lambda bi, ti: (0, 0)),
                pl.BlockSpec((H_pad, H_pad), lambda bi, ti: (0, 0)),
                pl.BlockSpec((1, H_pad), lambda bi, ti: (0, 0)),
                pl.BlockSpec((H_pad, V_pad), lambda bi, ti: (0, 0)),
                pl.BlockSpec((1, V_pad), lambda bi, ti: (0, 0)),
            ],
            out_specs=pl.BlockSpec((None, rows, V_pad),
                                   lambda bi, ti: (bi, ti, 0)),
            scratch_shapes=[
                pltpu.VMEM((rows, H_pad), jnp.float32),    # u = gather + b_h
                pltpu.VMEM((rows, H_pad), compute_dtype),  # stacked h_t
                pltpu.VMEM((B_tile, H_pad), jnp.float32),  # hidden carry
            ],
        ),
        compiler_params=pltpu.CompilerParams(
            dimension_semantics=("parallel", "arbitrary"),
            vmem_limit_bytes=vmem_limit,
        ),
    )(tok, table_p, w_hh_p, b_h_p, w_fc_p, b_fc_p)

    # Un-pad and return batch-first logits, matching PyTorch semantics.
    out = out.reshape(nbt, T_pad, B_tile, V_pad)[:, :T, :, :V]
    out = jnp.transpose(out, (0, 2, 1, 3)).reshape(nbt * B_tile, T, V)
    return out[:B]


def init_params(key, vocab_size, hidden_size, emb_size=16):
    ks = jax.random.split(key, 7)
    scale = 1.0 / jnp.sqrt(hidden_size)
    params = {
        "embedding": jax.random.normal(ks[0], (vocab_size, emb_size),
                                       jnp.float32),
        # PyTorch stores W_ih as (H, E) and computes x @ W_ih^T; we store the
        # transposed layout directly.
        "w_ih": jax.random.uniform(ks[1], (emb_size, hidden_size),
                                   jnp.float32, -scale, scale),
        "w_hh": jax.random.uniform(ks[2], (hidden_size, hidden_size),
                                   jnp.float32, -scale, scale),
        # b_h = b_ih + b_hh (they always appear summed in the recurrence).
        "b_h": (jax.random.uniform(ks[3], (1, hidden_size),
                                   jnp.float32, -scale, scale)
                + jax.random.uniform(ks[4], (1, hidden_size),
                                     jnp.float32, -scale, scale)),
        "w_fc": jax.random.uniform(ks[5], (hidden_size, vocab_size),
                                   jnp.float32, -scale, scale),
        "b_fc": jax.random.uniform(ks[6], (1, vocab_size),
                                   jnp.float32, -scale, scale),
    }
    return params


if __name__ == "__main__":
    VOCAB = 32
    HIDDEN = 32
    BATCH = 2
    SEQ = 8

    key = jax.random.PRNGKey(0)
    k_params, k_tokens = jax.random.split(key)

    params = init_params(k_params, VOCAB, HIDDEN)
    tokens = jax.random.randint(k_tokens, (BATCH, SEQ), 0, VOCAB,
                                dtype=jnp.int32)

    # Pure-JAX reference of the CharRNN forward pass.
    def ref_forward(tokens, p):
        x = p["embedding"][tokens]                      # (B, T, E)
        Bq, Tq, _ = x.shape
        Hq = p["w_hh"].shape[0]
        h = jnp.zeros((Bq, Hq), jnp.float32)
        outs = []
        for t in range(Tq):
            h = jnp.tanh(x[:, t] @ p["w_ih"] + h @ p["w_hh"] + p["b_h"])
            outs.append(h @ p["w_fc"] + p["b_fc"])
        return jnp.stack(outs, axis=1)                  # (B, T, V)

    ref = ref_forward(tokens, params)

    # f32 path: faithful to the reference recurrence.
    logits_f32 = jax.block_until_ready(
        char_rnn_forward(tokens, params, compute_dtype=jnp.float32))
    assert logits_f32.shape == (BATCH, SEQ, VOCAB)
    assert logits_f32.dtype == jnp.float32
    assert jnp.allclose(logits_f32, ref, atol=1e-4, rtol=1e-4)

    # bf16-weight path (v6e/v7x MXU throughput); relaxed tolerance.
    logits_bf16 = jax.block_until_ready(
        char_rnn_forward(tokens, params, compute_dtype=jnp.bfloat16))
    assert logits_bf16.shape == (BATCH, SEQ, VOCAB)
    assert jnp.allclose(logits_bf16, ref, atol=1e-1, rtol=1e-1)

    print("KERNEL_OK")
</pallas_src>

<mosaic_0001>
module attributes {stable_mosaic.version = 11 : i64} {
  func.func @char_rnn_kernel(%arg0: i32, %arg1: i32, %arg2: memref<1x64x1xi32, #tpu.memory_space<vmem>>, %arg3: memref<128x128xf32, #tpu.memory_space<vmem>>, %arg4: memref<128x128xf32, #tpu.memory_space<vmem>>, %arg5: memref<1x128xf32, #tpu.memory_space<vmem>>, %arg6: memref<128x128xf32, #tpu.memory_space<vmem>>, %arg7: memref<1x128xf32, #tpu.memory_space<vmem>>, %arg8: memref<1x64x128xf32, #tpu.memory_space<vmem>>, %arg9: memref<64x128xf32, #tpu.memory_space<vmem>>, %arg10: memref<64x128xf32, #tpu.memory_space<vmem>>, %arg11: memref<8x128xf32, #tpu.memory_space<vmem>>) attributes {dimension_semantics = [#tpu.dimension_semantics<parallel>, #tpu.dimension_semantics<arbitrary>], iteration_bounds = array<i64: 1, 1>, scalar_prefetch = 0 : i64, scratch_operands = 3 : i64, tpu.core_type = #tpu.core_type<tc>, window_params = [{transform_indices = @transform_0, window_bounds = array<i64: 1, 64, 1>}, {pipeline_mode = #tpu.pipeline_mode<synchronous>, transform_indices = @transform_1, window_bounds = array<i64: 128, 128>}, {pipeline_mode = #tpu.pipeline_mode<synchronous>, transform_indices = @transform_2, window_bounds = array<i64: 128, 128>}, {pipeline_mode = #tpu.pipeline_mode<synchronous>, transform_indices = @transform_3, window_bounds = array<i64: 1, 128>}, {pipeline_mode = #tpu.pipeline_mode<synchronous>, transform_indices = @transform_4, window_bounds = array<i64: 128, 128>}, {pipeline_mode = #tpu.pipeline_mode<synchronous>, transform_indices = @transform_5, window_bounds = array<i64: 1, 128>}, {transform_indices = @transform_6, window_bounds = array<i64: 1, 64, 128>}]} {
    %c0_i32 = arith.constant 0 : i32
    %0 = arith.cmpi eq, %arg1, %c0_i32 : i32
    %1 = arith.extui %0 : i1 to i32
    %c0_i32_0 = arith.constant 0 : i32
    %2 = arith.cmpi ne, %1, %c0_i32_0 : i32
    scf.if %2 {
      %cst_60 = arith.constant 0.000000e+00 : f32
      %101 = vector.broadcast %cst_60 : f32 to vector<8x128xf32>
      %c0_61 = arith.constant 0 : index
      %c0_62 = arith.constant 0 : index
      %102 = vector.load %arg11[%c0_61, %c0_62] : memref<8x128xf32, #tpu.memory_space<vmem>>, vector<8x128xf32>
      tpu.vector_store %arg11[%c0_61, %c0_62], %101 {strides = array<i32>} : memref<8x128xf32, #tpu.memory_space<vmem>>, vector<8x128xf32>,
    } else {
    }
    %c0 = arith.constant 0 : index
    %c0_1 = arith.constant 0 : index
    %c0_2 = arith.constant 0 : index
    %3 = vector.load %arg2[%c0, %c0_1, %c0_2] : memref<1x64x1xi32, #tpu.memory_space<vmem>>, vector<1x64x1xi32>
    %4 = vector.shape_cast %3 : vector<1x64x1xi32> to vector<64x1xi32>
    %5 = tpu.iota {dimensions = array<i32: 1>} : vector<64x128xi32>
    %6 = vector.broadcast %4 : vector<64x1xi32> to vector<64x128xi32>
    %7 = arith.cmpi eq, %5, %6 : vector<64x128xi32>
    %cst = arith.constant 1.000000e+00 : f32
    %cst_3 = arith.constant 0.000000e+00 : f32
    %8 = vector.broadcast %cst : f32 to vector<64x128xf32>
    %9 = vector.broadcast %cst_3 : f32 to vector<64x128xf32>
    %10 = arith.select %7, %8, %9 : vector<64x128xi1>, vector<64x128xf32>
    %c0_4 = arith.constant 0 : index
    %c0_5 = arith.constant 0 : index
    %11 = vector.load %arg3[%c0_4, %c0_5] : memref<128x128xf32, #tpu.memory_space<vmem>>, vector<128x128xf32>
    %cst_6 = arith.constant dense<0.000000e+00> : vector<64x128xf32>
    %12 = tpu.matmul %10, %11, %cst_6 {dimension_numbers = #tpu.dot_dimension_numbers<[1], [0], [0], [1], [0, 0, 1, 1], [], []>} : vector<64x128xf32>, vector<128x128xf32>, vector<64x128xf32> -> vector<64x128xf32>
    %c0_7 = arith.constant 0 : index
    %c0_8 = arith.constant 0 : index
    %13 = vector.load %arg5[%c0_7, %c0_8] : memref<1x128xf32, #tpu.memory_space<vmem>>, vector<1x128xf32>
    %14 = vector.broadcast %13 : vector<1x128xf32> to vector<64x128xf32>
    %15 = arith.addf %12, %14 : vector<64x128xf32>
    %c0_9 = arith.constant 0 : index
    %c0_10 = arith.constant 0 : index
    %16 = vector.load %arg9[%c0_9, %c0_10] : memref<64x128xf32, #tpu.memory_space<vmem>>, vector<64x128xf32>
    tpu.vector_store %arg9[%c0_9, %c0_10], %15 {strides = array<i32>} : memref<64x128xf32, #tpu.memory_space<vmem>>, vector<64x128xf32>,
    %c0_11 = arith.constant 0 : index
    %c0_12 = arith.constant 0 : index
    %17 = vector.load %arg4[%c0_11, %c0_12] : memref<128x128xf32, #tpu.memory_space<vmem>>, vector<128x128xf32>
    %c0_13 = arith.constant 0 : index
    %c0_14 = arith.constant 0 : index
    %18 = vector.load %arg11[%c0_13, %c0_14] : memref<8x128xf32, #tpu.memory_space<vmem>>, vector<8x128xf32>
    %c0_i32_15 = arith.constant 0 : i32
    %c8_i32 = arith.constant 8 : i32
    %19 = arith.muli %c0_i32_15, %c8_i32 : i32
    %20 = tpu.assume_multiple %19, 8 : i32
    %21 = arith.index_cast %20 : i32 to index
    %c0_16 = arith.constant 0 : index
    %22 = vector.load %arg9[%21, %c0_16] : memref<64x128xf32, #tpu.memory_space<vmem>>, vector<8x128xf32>
    %cst_17 = arith.constant dense<0.000000e+00> : vector<8x128xf32>
    %23 = tpu.matmul %18, %17, %cst_17 {dimension_numbers = #tpu.dot_dimension_numbers<[1], [0], [0], [1], [0, 0, 1, 1], [], []>} : vector<8x128xf32>, vector<128x128xf32>, vector<8x128xf32> -> vector<8x128xf32>
    %24 = arith.addf %22, %23 : vector<8x128xf32>
    %25 = math.tanh %24 : vector<8x128xf32>
    %26 = arith.index_cast %20 : i32 to index
    %c0_18 = arith.constant 0 : index
    %27 = vector.load %arg10[%26, %c0_18] : memref<64x128xf32, #tpu.memory_space<vmem>>, vector<8x128xf32>
    tpu.vector_store %arg10[%26, %c0_18], %25 {strides = array<i32>} : memref<64x128xf32, #tpu.memory_space<vmem>>, vector<8x128xf32>,
    %c1_i32 = arith.constant 1 : i32
    %c8_i32_19 = arith.constant 8 : i32
    %28 = arith.muli %c1_i32, %c8_i32_19 : i32
    %29 = tpu.assume_multiple %28, 8 : i32
    %30 = arith.index_cast %29 : i32 to index
    %c0_20 = arith.constant 0 : index
    %31 = vector.load %arg9[%30, %c0_20] : memref<64x128xf32, #tpu.memory_space<vmem>>, vector<8x128xf32>
    %cst_21 = arith.constant dense<0.000000e+00> : vector<8x128xf32>
    %32 = tpu.matmul %25, %17, %cst_21 {dimension_numbers = #tpu.dot_dimension_numbers<[1], [0], [0], [1], [0, 0, 1, 1], [], []>} : vector<8x128xf32>, vector<128x128xf32>, vector<8x128xf32> -> vector<8x128xf32>
    %33 = arith.addf %31, %32 : vector<8x128xf32>
    %34 = math.tanh %33 : vector<8x128xf32>
    %35 = arith.index_cast %29 : i32 to index
    %c0_22 = arith.constant 0 : index
    %36 = vector.load %arg10[%35, %c0_22] : memref<64x128xf32, #tpu.memory_space<vmem>>, vector<8x128xf32>
    tpu.vector_store %arg10[%35, %c0_22], %34 {strides = array<i32>} : memref<64x128xf32, #tpu.memory_space<vmem>>, vector<8x128xf32>,
    %c2_i32 = arith.constant 2 : i32
    %c8_i32_23 = arith.constant 8 : i32
    %37 = arith.muli %c2_i32, %c8_i32_23 : i32
    %38 = tpu.assume_multiple %37, 8 : i32
    %39 = arith.index_cast %38 : i32 to index
    %c0_24 = arith.constant 0 : index
    %40 = vector.load %arg9[%39, %c0_24] : memref<64x128xf32, #tpu.memory_space<vmem>>, vector<8x128xf32>
    %cst_25 = arith.constant dense<0.000000e+00> : vector<8x128xf32>
    %41 = tpu.matmul %34, %17, %cst_25 {dimension_numbers = #tpu.dot_dimension_numbers<[1], [0], [0], [1], [0, 0, 1, 1], [], []>} : vector<8x128xf32>, vector<128x128xf32>, vector<8x128xf32> -> vector<8x128xf32>
    %42 = arith.addf %40, %41 : vector<8x128xf32>
    %43 = math.tanh %42 : vector<8x128xf32>
    %44 = arith.index_cast %38 : i32 to index
    %c0_26 = arith.constant 0 : index
    %45 = vector.load %arg10[%44, %c0_26] : memref<64x128xf32, #tpu.memory_space<vmem>>, vector<8x128xf32>
    tpu.vector_store %arg10[%44, %c0_26], %43 {strides = array<i32>} : memref<64x128xf32, #tpu.memory_space<vmem>>, vector<8x128xf32>,
    %c3_i32 = arith.constant 3 : i32
    %c8_i32_27 = arith.constant 8 : i32
    %46 = arith.muli %c3_i32, %c8_i32_27 : i32
    %47 = tpu.assume_multiple %46, 8 : i32
    %48 = arith.index_cast %47 : i32 to index
    %c0_28 = arith.constant 0 : index
    %49 = vector.load %arg9[%48, %c0_28] : memref<64x128xf32, #tpu.memory_space<vmem>>, vector<8x128xf32>
    %cst_29 = arith.constant dense<0.000000e+00> : vector<8x128xf32>
    %50 = tpu.matmul %43, %17, %cst_29 {dimension_numbers = #tpu.dot_dimension_numbers<[1], [0], [0], [1], [0, 0, 1, 1], [], []>} : vector<8x128xf32>, vector<128x128xf32>, vector<8x128xf32> -> vector<8x128xf32>
    %51 = arith.addf %49, %50 : vector<8x128xf32>
    %52 = math.tanh %51 : vector<8x128xf32>
    %53 = arith.index_cast %47 : i32 to index
    %c0_30 = arith.constant 0 : index
    %54 = vector.load %arg10[%53, %c0_30] : memref<64x128xf32, #tpu.memory_space<vmem>>, vector<8x128xf32>
    tpu.vector_store %arg10[%53, %c0_30], %52 {strides = array<i32>} : memref<64x128xf32, #tpu.memory_space<vmem>>, vector<8x128xf32>,
    %c4_i32 = arith.constant 4 : i32
    %c8_i32_31 = arith.constant 8 : i32
    %55 = arith.muli %c4_i32, %c8_i32_31 : i32
    %56 = tpu.assume_multiple %55, 8 : i32
    %57 = arith.index_cast %56 : i32 to index
    %c0_32 = arith.constant 0 : index
    %58 = vector.load %arg9[%57, %c0_32] : memref<64x128xf32, #tpu.memory_space<vmem>>, vector<8x128xf32>
    %cst_33 = arith.constant dense<0.000000e+00> : vector<8x128xf32>
    %59 = tpu.matmul %52, %17, %cst_33 {dimension_numbers = #tpu.dot_dimension_numbers<[1], [0], [0], [1], [0, 0, 1, 1], [], []>} : vector<8x128xf32>, vector<128x128xf32>, vector<8x128xf32> -> vector<8x128xf32>
    %60 = arith.addf %58, %59 : vector<8x128xf32>
    %61 = math.tanh %60 : vector<8x128xf32>
    %62 = arith.index_cast %56 : i32 to index
    %c0_34 = arith.constant 0 : index
    %63 = vector.load %arg10[%62, %c0_34] : memref<64x128xf32, #tpu.memory_space<vmem>>, vector<8x128xf32>
    tpu.vector_store %arg10[%62, %c0_34], %61 {strides = array<i32>} : memref<64x128xf32, #tpu.memory_space<vmem>>, vector<8x128xf32>,
    %c5_i32 = arith.constant 5 : i32
    %c8_i32_35 = arith.constant 8 : i32
    %64 = arith.muli %c5_i32, %c8_i32_35 : i32
    %65 = tpu.assume_multiple %64, 8 : i32
    %66 = arith.index_cast %65 : i32 to index
    %c0_36 = arith.constant 0 : index
    %67 = vector.load %arg9[%66, %c0_36] : memref<64x128xf32, #tpu.memory_space<vmem>>, vector<8x128xf32>
    %cst_37 = arith.constant dense<0.000000e+00> : vector<8x128xf32>
    %68 = tpu.matmul %61, %17, %cst_37 {dimension_numbers = #tpu.dot_dimension_numbers<[1], [0], [0], [1], [0, 0, 1, 1], [], []>} : vector<8x128xf32>, vector<128x128xf32>, vector<8x128xf32> -> vector<8x128xf32>
    %69 = arith.addf %67, %68 : vector<8x128xf32>
    %70 = math.tanh %69 : vector<8x128xf32>
    %71 = arith.index_cast %65 : i32 to index
    %c0_38 = arith.constant 0 : index
    %72 = vector.load %arg10[%71, %c0_38] : memref<64x128xf32, #tpu.memory_space<vmem>>, vector<8x128xf32>
    tpu.vector_store %arg10[%71, %c0_38], %70 {strides = array<i32>} : memref<64x128xf32, #tpu.memory_space<vmem>>, vector<8x128xf32>,
    %c6_i32 = arith.constant 6 : i32
    %c8_i32_39 = arith.constant 8 : i32
    %73 = arith.muli %c6_i32, %c8_i32_39 : i32
    %74 = tpu.assume_multiple %73, 8 : i32
    %75 = arith.index_cast %74 : i32 to index
    %c0_40 = arith.constant 0 : index
    %76 = vector.load %arg9[%75, %c0_40] : memref<64x128xf32, #tpu.memory_space<vmem>>, vector<8x128xf32>
    %cst_41 = arith.constant dense<0.000000e+00> : vector<8x128xf32>
    %77 = tpu.matmul %70, %17, %cst_41 {dimension_numbers = #tpu.dot_dimension_numbers<[1], [0], [0], [1], [0, 0, 1, 1], [], []>} : vector<8x128xf32>, vector<128x128xf32>, vector<8x128xf32> -> vector<8x128xf32>
    %78 = arith.addf %76, %77 : vector<8x128xf32>
    %79 = math.tanh %78 : vector<8x128xf32>
    %80 = arith.index_cast %74 : i32 to index
    %c0_42 = arith.constant 0 : index
    %81 = vector.load %arg10[%80, %c0_42] : memref<64x128xf32, #tpu.memory_space<vmem>>, vector<8x128xf32>
    tpu.vector_store %arg10[%80, %c0_42], %79 {strides = array<i32>} : memref<64x128xf32, #tpu.memory_space<vmem>>, vector<8x128xf32>,
    %c7_i32 = arith.constant 7 : i32
    %c8_i32_43 = arith.constant 8 : i32
    %82 = arith.muli %c7_i32, %c8_i32_43 : i32
    %83 = tpu.assume_multiple %82, 8 : i32
    %84 = arith.index_cast %83 : i32 to index
    %c0_44 = arith.constant 0 : index
    %85 = vector.load %arg9[%84, %c0_44] : memref<64x128xf32, #tpu.memory_space<vmem>>, vector<8x128xf32>
    %cst_45 = arith.constant dense<0.000000e+00> : vector<8x128xf32>
    %86 = tpu.matmul %79, %17, %cst_45 {dimension_numbers = #tpu.dot_dimension_numbers<[1], [0], [0], [1], [0, 0, 1, 1], [], []>} : vector<8x128xf32>, vector<128x128xf32>, vector<8x128xf32> -> vector<8x128xf32>
    %87 = arith.addf %85, %86 : vector<8x128xf32>
    %88 = math.tanh %87 : vector<8x128xf32>
    %89 = arith.index_cast %83 : i32 to index
    %c0_46 = arith.constant 0 : index
    %90 = vector.load %arg10[%89, %c0_46] : memref<64x128xf32, #tpu.memory_space<vmem>>, vector<8x128xf32>
    tpu.vector_store %arg10[%89, %c0_46], %88 {strides = array<i32>} : memref<64x128xf32, #tpu.memory_space<vmem>>, vector<8x128xf32>,
    %c8_i32_47 = arith.constant 8 : i32
    %c0_48 = arith.constant 0 : index
    %c0_49 = arith.constant 0 : index
    %91 = vector.load %arg11[%c0_48, %c0_49] : memref<8x128xf32, #tpu.memory_space<vmem>>, vector<8x128xf32>
    tpu.vector_store %arg11[%c0_48, %c0_49], %88 {strides = array<i32>} : memref<8x128xf32, #tpu.memory_space<vmem>>, vector<8x128xf32>,
    %c0_50 = arith.constant 0 : index
    %c0_51 = arith.constant 0 : index
    %92 = vector.load %arg10[%c0_50, %c0_51] : memref<64x128xf32, #tpu.memory_space<vmem>>, vector<64x128xf32>
    %c0_52 = arith.constant 0 : index
    %c0_53 = arith.constant 0 : index
    %93 = vector.load %arg6[%c0_52, %c0_53] : memref<128x128xf32, #tpu.memory_space<vmem>>, vector<128x128xf32>
    %cst_54 = arith.constant dense<0.000000e+00> : vector<64x128xf32>
    %94 = tpu.matmul %92, %93, %cst_54 {dimension_numbers = #tpu.dot_dimension_numbers<[1], [0], [0], [1], [0, 0, 1, 1], [], []>} : vector<64x128xf32>, vector<128x128xf32>, vector<64x128xf32> -> vector<64x128xf32>
    %c0_55 = arith.constant 0 : index
    %c0_56 = arith.constant 0 : index
    %95 = vector.load %arg7[%c0_55, %c0_56] : memref<1x128xf32, #tpu.memory_space<vmem>>, vector<1x128xf32>
    %96 = vector.broadcast %95 : vector<1x128xf32> to vector<64x128xf32>
    %97 = arith.addf %94, %96 : vector<64x128xf32>
    %c0_57 = arith.constant 0 : index
    %c0_58 = arith.constant 0 : index
    %c0_59 = arith.constant 0 : index
    %98 = vector.load %arg8[%c0_57, %c0_58, %c0_59] : memref<1x64x128xf32, #tpu.memory_space<vmem>>, vector<1x64x128xf32>
    %99 = vector.shape_cast %98 : vector<1x64x128xf32> to vector<64x128xf32>
    %100 = vector.shape_cast %97 : vector<64x128xf32> to vector<1x64x128xf32>
    tpu.vector_store %arg8[%c0_57, %c0_58, %c0_59], %100 {strides = array<i32>} : memref<1x64x128xf32, #tpu.memory_space<vmem>>, vector<1x64x128xf32>,
    return
  }
  func.func @transform_0(%arg0: i32, %arg1: i32) -> (i32, i32, i32) {
    %c0_i32 = arith.constant 0 : i32
    %c0_i32_0 = arith.constant 0 : i32
    return %arg0, %arg1, %c0_i32 : i32, i32, i32
  }
  func.func @transform_1(%arg0: i32, %arg1: i32) -> (i32, i32) {
    %c0_i32 = arith.constant 0 : i32
    %c0_i32_0 = arith.constant 0 : i32
    %c0_i32_1 = arith.constant 0 : i32
    return %c0_i32, %c0_i32_0 : i32, i32
  }
  func.func @transform_2(%arg0: i32, %arg1: i32) -> (i32, i32) {
    %c0_i32 = arith.constant 0 : i32
    %c0_i32_0 = arith.constant 0 : i32
    %c0_i32_1 = arith.constant 0 : i32
    return %c0_i32, %c0_i32_0 : i32, i32
  }
  func.func @transform_3(%arg0: i32, %arg1: i32) -> (i32, i32) {
    %c0_i32 = arith.constant 0 : i32
    %c0_i32_0 = arith.constant 0 : i32
    %c0_i32_1 = arith.constant 0 : i32
    return %c0_i32, %c0_i32_0 : i32, i32
  }
  func.func @transform_4(%arg0: i32, %arg1: i32) -> (i32, i32) {
    %c0_i32 = arith.constant 0 : i32
    %c0_i32_0 = arith.constant 0 : i32
    %c0_i32_1 = arith.constant 0 : i32
    return %c0_i32, %c0_i32_0 : i32, i32
  }
  func.func @transform_5(%arg0: i32, %arg1: i32) -> (i32, i32) {
    %c0_i32 = arith.constant 0 : i32
    %c0_i32_0 = arith.constant 0 : i32
    %c0_i32_1 = arith.constant 0 : i32
    return %c0_i32, %c0_i32_0 : i32, i32
  }
  func.func @transform_6(%arg0: i32, %arg1: i32) -> (i32, i32, i32) {
    %c0_i32 = arith.constant 0 : i32
    %c0_i32_0 = arith.constant 0 : i32
    return %arg0, %arg1, %c0_i32 : i32, i32, i32
  }
}

</mosaic_0001>

<llo_original>
// kernel: tpu_custom_call.1
$region0: #{tpu_custom_call.1}
  #allocation0 [shape = 'u32[]', space=smem, size = 0x4, offset = 0x4, fixed_abs, tag = 'smem constant byte address 0x4 - core index']
  #allocation1 [shape = 'u32[144,128]{1,0:T(1,128)}', space=vmem, size = 0x12000, scoped, tag = 'internal scratch']
  #allocation2 [shape = 'f32[64,128]{1,0:T(8,128)}', space=vmem, size = 0x8000, scoped, tag = 'scratch operand']
  #allocation3 [shape = 'f32[64,128]{1,0:T(8,128)}', space=vmem, size = 0x8000, scoped, tag = 'scratch operand']
  #allocation4 [shape = 'f32[8,128]{1,0:T(8,128)}', space=vmem, size = 0x1000, scoped, tag = 'scratch operand']
  %s0 = inlined_call_operand.vmem [shape: s32[1,64,1], index: 0, kind: input, shape index: {}]
  %s1 = inlined_call_operand.hbm [shape: f32[128,128], index: 1, kind: input, shape index: {}]
  %s2 = inlined_call_operand.hbm [shape: f32[128,128], index: 2, kind: input, shape index: {}]
  %s3 = inlined_call_operand.vmem [shape: f32[1,128], index: 3, kind: input, shape index: {}]
  %s4 = inlined_call_operand.hbm [shape: f32[128,128], index: 4, kind: input, shape index: {}]
  %s5 = inlined_call_operand.vmem [shape: f32[1,128], index: 5, kind: input, shape index: {}]
  %s6 = inlined_call_operand.hbm [shape: f32[1,64,128], index: 6, kind: output, shape index: {}]
  %s7 = sld [smem:[#allocation0]]
  $region50: #{tpu_custom_call.1} parent=0
    _
  %s9 = ssub.s32 1, %s7
  %s10 = scalar_select 0, %s9, %s7
  $region1: #{tpu_custom_call.1} parent=0
    #allocation5 [shape = 'u8[65536]{0}', space=vmem, size = 0x10000, scoped, tag = 'input window, operand 1, single buffered']
    #allocation6 [shape = 's32[1]{0}', space=sflag, size = 0x4, scoped, tag = 'scoped memory for tpu_custom_call.1']
    #allocation7 [shape = 's32[1]{0}', space=sflag, size = 0x4, scoped, tag = 'scoped memory for tpu_custom_call.1']
    #allocation8 [shape = 'u8[65536]{0}', space=vmem, size = 0x10000, scoped, tag = 'input window, operand 2, single buffered']
    #allocation9 [shape = 's32[1]{0}', space=sflag, size = 0x4, scoped, tag = 'scoped memory for tpu_custom_call.1']
    #allocation10 [shape = 'u8[65536]{0}', space=vmem, size = 0x10000, scoped, tag = 'input window, operand 4, single buffered']
    #allocation11 [shape = 'u8[32768]{0}', space=vmem, size = 0x8000, scoped, tag = 'output window, operand 0, single buffered']
    %11 = vsyncpa [#allocation6], 0
    %12 = vsyncpa [#allocation9], 0
    %13 = vsyncpa [#allocation7], 0
    // Predicated region
    $region2: #{tpu_custom_call.1} parent=1 // pred_check
      _
    $region3: #{tpu_custom_call.1} parent=1 // pred_check_branch
      %15 = sbr.rel (0) target = $region5
    $region4: #{tpu_custom_call.1} parent=1 // pred_region
      _
    $region5: #{tpu_custom_call.1} parent=1 // pred_fallthru
      _
    // Predicated region
    $region6: #{tpu_custom_call.1} parent=1 // pred_check
      _
    $region7: #{tpu_custom_call.1} parent=1 // pred_check_branch
      %17 = sbr.rel (0) target = $region9
    $region8: #{tpu_custom_call.1} parent=1 // pred_region
      %s19 = ssub.s32 2048, 2048
      %20 = vsyncadd [#allocation6], %s19
      %s21 = sshll.u32 [#allocation5], 4
      %s22 = int_to_ptr.vmem [resolvable:$true] %s21
      %27 = dma.hbm_to_vmem [thread:$0]  %s1, 2048, %s22, [#allocation6], 128, 128, 8
    $region9: #{tpu_custom_call.1} parent=1 // pred_fallthru
      _
    // Predicated region
    $region10: #{tpu_custom_call.1} parent=1 // pred_check
      _
    $region11: #{tpu_custom_call.1} parent=1 // pred_check_branch
      %29 = sbr.rel (0) target = $region13
    $region12: #{tpu_custom_call.1} parent=1 // pred_region
      %s31 = ssub.s32 2048, 2048
      %32 = vsyncadd [#allocation9], %s31
      %s33 = sshll.u32 [#allocation8], 4
      %s34 = int_to_ptr.vmem [resolvable:$true] %s33
      %39 = dma.hbm_to_vmem [thread:$0]  %s2, 2048, %s34, [#allocation9], 128, 128, 8
    $region13: #{tpu_custom_call.1} parent=1 // pred_fallthru
      _
    // Predicated region
    $region14: #{tpu_custom_call.1} parent=1 // pred_check
      _
    $region15: #{tpu_custom_call.1} parent=1 // pred_check_branch
      %41 = sbr.rel (0) target = $region17
    $region16: #{tpu_custom_call.1} parent=1 // pred_region
      _
    $region17: #{tpu_custom_call.1} parent=1 // pred_fallthru
      _
    // Predicated region
    $region18: #{tpu_custom_call.1} parent=1 // pred_check
      _
    $region19: #{tpu_custom_call.1} parent=1 // pred_check_branch
      %43 = sbr.rel (0) target = $region21
    $region20: #{tpu_custom_call.1} parent=1 // pred_region
      %s45 = ssub.s32 2048, 2048
      %46 = vsyncadd [#allocation9], %s45
      %s47 = sshll.u32 [#allocation10], 4
      %s48 = int_to_ptr.vmem [resolvable:$true] %s47
      %53 = dma.hbm_to_vmem [thread:$0]  %s4, 2048, %s48, [#allocation9], 128, 128, 8
    $region21: #{tpu_custom_call.1} parent=1 // pred_fallthru
      _
    // Predicated region
    $region22: #{tpu_custom_call.1} parent=1 // pred_check
      _
    $region23: #{tpu_custom_call.1} parent=1 // pred_check_branch
      %55 = sbr.rel (0) target = $region25
    $region24: #{tpu_custom_call.1} parent=1 // pred_region
      _
    $region25: #{tpu_custom_call.1} parent=1 // pred_fallthru
      _
    // Predicated region
    $region26: #{tpu_custom_call.1} parent=1 // pred_check
      _
    $region27: #{tpu_custom_call.1} parent=1 // pred_check_branch
      %57 = sbr.rel (0) target = $region29
    $region28: #{tpu_custom_call.1} parent=1 // pred_region
      %58 = dma.done [#allocation6], 2048
    $region29: #{tpu_custom_call.1} parent=1 // pred_fallthru
      _
    // Predicated region
    $region30: #{tpu_custom_call.1} parent=1 // pred_check
      _
    $region31: #{tpu_custom_call.1} parent=1 // pred_check_branch
      %60 = sbr.rel (0) target = $region33
    $region32: #{tpu_custom_call.1} parent=1 // pred_region
      %61 = dma.done [#allocation9], 2048
    $region33: #{tpu_custom_call.1} parent=1 // pred_fallthru
      _
    // Predicated region
    $region34: #{tpu_custom_call.1} parent=1 // pred_check
      _
    $region35: #{tpu_custom_call.1} parent=1 // pred_check_branch
      %63 = sbr.rel (0) target = $region37
    $region36: #{tpu_custom_call.1} parent=1 // pred_region
      %64 = dma.done [#allocation9], 2048
    $region37: #{tpu_custom_call.1} parent=1 // pred_fallthru
      _
    %p65 = scmp.eq.s32.totalorder 0, 0
    // Predicated region
    $region38: #{tpu_custom_call.1} parent=1 // pred_check
      %p66 = pneg %p65
    $region39: #{tpu_custom_call.1} parent=1 // pred_check_branch
      %68 = sbr.rel (%p66) target = $region41
    $region40: #{tpu_custom_call.1} parent=1 // pred_region
      %69 = vst [vmem:[#allocation4] sm:$0xff] 0.0
    $region41: #{tpu_custom_call.1} parent=1 // pred_fallthru
      _
    %v70 = vld [vmem:[%s0] sm:$0xff]
    %v71 = vld [vmem:[%s0 + $0x8] sm:$0xff]
    %v72 = vld [vmem:[%s0 + $0x10] sm:$0xff]
    %v73 = vld [vmem:[%s0 + $0x18] sm:$0xff]
    %v74 = vld [vmem:[%s0 + $0x20] sm:$0xff]
    %v75 = vld [vmem:[%s0 + $0x28] sm:$0xff]
    %v76 = vld [vmem:[%s0 + $0x30] sm:$0xff]
    %v77 = vld [vmem:[%s0 + $0x38] sm:$0xff]
    %v78 = vlaneseq
    %v79 = vand.u32 %v78, 127
    %80 = vset.pattern.permute.xlu0 0
    %81 = vperm.xlu0 %80, %v70
    %v82 = vpop.permute.xlu0 %81
    %83 = vset.pattern.permute.xlu0 0
    %84 = vperm.xlu0 %83, %v71
    %v85 = vpop.permute.xlu0 %84
    %86 = vset.pattern.permute.xlu0 0
    %87 = vperm.xlu0 %86, %v72
    %v88 = vpop.permute.xlu0 %87
    %89 = vset.pattern.permute.xlu0 0
    %90 = vperm.xlu0 %89, %v73
    %v91 = vpop.permute.xlu0 %90
    %92 = vset.pattern.permute.xlu0 0
    %93 = vperm.xlu0 %92, %v74
    %v94 = vpop.permute.xlu0 %93
    %95 = vset.pattern.permute.xlu0 0
    %96 = vperm.xlu0 %95, %v75
    %v97 = vpop.permute.xlu0 %96
    %98 = vset.pattern.permute.xlu0 0
    %99 = vperm.xlu0 %98, %v76
    %v100 = vpop.permute.xlu0 %99
    %101 = vset.pattern.permute.xlu0 0
    %102 = vperm.xlu0 %101, %v77
    %v103 = vpop.permute.xlu0 %102
    %vm104 = vcmp.eq.s32.totalorder %v79, %v82
    %vm105 = vcmp.eq.s32.totalorder %v79, %v85
    %vm106 = vcmp.eq.s32.totalorder %v79, %v88
    %vm107 = vcmp.eq.s32.totalorder %v79, %v91
    %vm108 = vcmp.eq.s32.totalorder %v79, %v94
    %vm109 = vcmp.eq.s32.totalorder %v79, %v97
    %vm110 = vcmp.eq.s32.totalorder %v79, %v100
    %vm111 = vcmp.eq.s32.totalorder %v79, %v103
    %v112 = vsel %vm104, 1.0, 0.0
    %v113 = vsel %vm105, 1.0, 0.0
    %v114 = vsel %vm106, 1.0, 0.0
    %v115 = vsel %vm107, 1.0, 0.0
    %v116 = vsel %vm108, 1.0, 0.0
    %v117 = vsel %vm109, 1.0, 0.0
    %v118 = vsel %vm110, 1.0, 0.0
    %v119 = vsel %vm111, 1.0, 0.0
    %v120 = vld [vmem:[#allocation5] sm:$0xff]
    %v121 = vld [vmem:[#allocation5 + $0x8] sm:$0xff]
    %v122 = vld [vmem:[#allocation5 + $0x10] sm:$0xff]
    %v123 = vld [vmem:[#allocation5 + $0x18] sm:$0xff]
    %v124 = vld [vmem:[#allocation5 + $0x20] sm:$0xff]
    %v125 = vld [vmem:[#allocation5 + $0x28] sm:$0xff]
    %v126 = vld [vmem:[#allocation5 + $0x30] sm:$0xff]
    %v127 = vld [vmem:[#allocation5 + $0x38] sm:$0xff]
    %v128 = vld [vmem:[#allocation5 + $0x40] sm:$0xff]
    %v129 = vld [vmem:[#allocation5 + $0x48] sm:$0xff]
    %v130 = vld [vmem:[#allocation5 + $0x50] sm:$0xff]
    %v131 = vld [vmem:[#allocation5 + $0x58] sm:$0xff]
    %v132 = vld [vmem:[#allocation5 + $0x60] sm:$0xff]
    %v133 = vld [vmem:[#allocation5 + $0x68] sm:$0xff]
    %v134 = vld [vmem:[#allocation5 + $0x70] sm:$0xff]
    %v135 = vld [vmem:[#allocation5 + $0x78] sm:$0xff]
    %v136 = vld [vmem:[%s3] sm:$0x1]
    %v138 = vlaneseq
    %v139 = vshrl.u32 %v138, 7
    %v140 = vsub.s32 0, %v139
    %v141 = vrot.slane %v136, %v140
    %143 = vmatprep.subr.mxu0 0.0
    %144 = vmatpush1.msra.mxu0 %v120
    %145 = vmatprep.subr.mxu0 0.0
    %146 = vmatpush1.msra.mxu0 %v121
    %147 = vmatprep.subr.mxu0 0.0
    %148 = vmatpush1.msra.mxu0 %v122
    %149 = vmatprep.subr.mxu0 0.0
    %150 = vmatpush1.msra.mxu0 %v123
    %151 = vmatprep.subr.mxu0 0.0
    %152 = vmatpush1.msra.mxu0 %v124
    %153 = vmatprep.subr.mxu0 0.0
    %154 = vmatpush1.msra.mxu0 %v125
    %155 = vmatprep.subr.mxu0 0.0
    %156 = vmatpush1.msra.mxu0 %v126
    %157 = vmatprep.subr.mxu0 0.0
    %158 = vmatpush1.msra.mxu0 %v127
    %159 = vmatprep.subr.mxu0 0.0
    %160 = vmatpush1.msra.mxu0 %v128
    %161 = vmatprep.subr.mxu0 0.0
    %162 = vmatpush1.msra.mxu0 %v129
    %163 = vmatprep.subr.mxu0 0.0
    %164 = vmatpush1.msra.mxu0 %v130
    %165 = vmatprep.subr.mxu0 0.0
    %166 = vmatpush1.msra.mxu0 %v131
    %167 = vmatprep.subr.mxu0 0.0
    %168 = vmatpush1.msra.mxu0 %v132
    %169 = vmatprep.subr.mxu0 0.0
    %170 = vmatpush1.msra.mxu0 %v133
    %171 = vmatprep.subr.mxu0 0.0
    %172 = vmatpush1.msra.mxu0 %v134
    %173 = vmatprep.subr.mxu0 0.0
    %174 = vmatpush1.msra.mxu0 %v135
    %175 = vmatprep.subr.mxu0 0.0
    %176 = vmatpush1.msra.mxu0 0.0
    %177 = vmatprep.subr.mxu0 0.0
    %178 = vmatpush1.msra.mxu0 0.0
    %179 = vmatprep.subr.mxu0 0.0
    %180 = vmatpush1.msra.mxu0 0.0
    %181 = vmatprep.subr.mxu0 0.0
    %182 = vmatpush1.msra.mxu0 0.0
    %183 = vmatprep.subr.mxu0 0.0
    %184 = vmatpush1.msra.mxu0 0.0
    %185 = vmatprep.subr.mxu0 0.0
    %186 = vmatpush1.msra.mxu0 0.0
    %187 = vmatprep.subr.mxu0 0.0
    %188 = vmatpush1.msra.mxu0 0.0
    %189 = vmatprep.subr.mxu0 0.0
    %190 = vmatpush1.msra.mxu0 0.0
    %191 = vmatprep.subr.mxu0 0.0
    %192 = vmatpush1.msra.mxu0 0.0
    %193 = vmatprep.subr.mxu0 0.0
    %194 = vmatpush1.msra.mxu0 0.0
    %195 = vmatprep.subr.mxu0 0.0
    %196 = vmatpush1.msra.mxu0 0.0
    %197 = vmatprep.subr.mxu0 0.0
    %198 = vmatpush1.msra.mxu0 0.0
    %199 = vmatprep.subr.mxu0 0.0
    %200 = vmatpush1.msra.mxu0 0.0
    %201 = vmatprep.subr.mxu0 0.0
    %202 = vmatpush1.msra.mxu0 0.0
    %203 = vmatprep.subr.mxu0 0.0
    %204 = vmatpush1.msra.mxu0 0.0
    %205 = vmatprep.subr.mxu0 0.0
    %206 = vmatpush1.msra.mxu0 0.0
    %207 = vmatprep.mubr.f32.mxu0 0.0
    %208 = vmatmul.mubr.f32.gmra.mrb[0].mxu0 %v112
    %v209 = vpop.f32.mrb[0].mxu0
    %v210 = vadd.f32 %v141, %v209
    %v211 = vpop.f32.mrb[0].mxu0
    %212 = vmatprep.mubr.f32.mxu0 0.0
    %213 = vmatmul.mubr.f32.gmra.mrb[0].mxu0 %v113
    %v214 = vpop.f32.mrb[0].mxu0
    %v215 = vadd.f32 %v141, %v214
    %v216 = vpop.f32.mrb[0].mxu0
    %217 = vmatprep.mubr.f32.mxu0 0.0
    %218 = vmatmul.mubr.f32.gmra.mrb[0].mxu0 %v114
    %v219 = vpop.f32.mrb[0].mxu0
    %v220 = vadd.f32 %v141, %v219
    %v221 = vpop.f32.mrb[0].mxu0
    %222 = vmatprep.mubr.f32.mxu0 0.0
    %223 = vmatmul.mubr.f32.gmra.mrb[0].mxu0 %v115
    %v224 = vpop.f32.mrb[0].mxu0
    %v225 = vadd.f32 %v141, %v224
    %v226 = vpop.f32.mrb[0].mxu0
    %227 = vmatprep.mubr.f32.mxu0 0.0
    %228 = vmatmul.mubr.f32.gmra.mrb[0].mxu0 %v116
    %v229 = vpop.f32.mrb[0].mxu0
    %v230 = vadd.f32 %v141, %v229
    %v231 = vpop.f32.mrb[0].mxu0
    %232 = vmatprep.mubr.f32.mxu0 0.0
    %233 = vmatmul.mubr.f32.gmra.mrb[0].mxu0 %v117
    %v234 = vpop.f32.mrb[0].mxu0
    %v235 = vadd.f32 %v141, %v234
    %v236 = vpop.f32.mrb[0].mxu0
    %237 = vmatprep.mubr.f32.mxu0 0.0
    %238 = vmatmul.mubr.f32.gmra.mrb[0].mxu0 %v118
    %v239 = vpop.f32.mrb[0].mxu0
    %v240 = vadd.f32 %v141, %v239
    %v241 = vpop.f32.mrb[0].mxu0
    %242 = vmatprep.mubr.f32.mxu0 0.0
    %243 = vmatmul.mubr.f32.gmra.mrb[0].mxu0 %v119
    %v244 = vpop.f32.mrb[0].mxu0
    %v245 = vadd.f32 %v141, %v244
    %v246 = vpop.f32.mrb[0].mxu0
    %247 = vdwg.mxu0
    %248 = vst [vmem:[#allocation2] sm:$0xff] %v210
    %249 = vst [vmem:[#allocation2 + $0x8] sm:$0xff] %v215
    %250 = vst [vmem:[#allocation2 + $0x10] sm:$0xff] %v220
    %251 = vst [vmem:[#allocation2 + $0x18] sm:$0xff] %v225
    %252 = vst [vmem:[#allocation2 + $0x20] sm:$0xff] %v230
    %253 = vst [vmem:[#allocation2 + $0x28] sm:$0xff] %v235
    %254 = vst [vmem:[#allocation2 + $0x30] sm:$0xff] %v240
    %255 = vst [vmem:[#allocation2 + $0x38] sm:$0xff] %v245
    %v256 = vld [vmem:[#allocation8] sm:$0xff]
    %v257 = vld [vmem:[#allocation8 + $0x8] sm:$0xff]
    %v258 = vld [vmem:[#allocation8 + $0x10] sm:$0xff]
    %v259 = vld [vmem:[#allocation8 + $0x18] sm:$0xff]
    %v260 = vld [vmem:[#allocation8 + $0x20] sm:$0xff]
    %v261 = vld [vmem:[#allocation8 + $0x28] sm:$0xff]
    %v262 = vld [vmem:[#allocation8 + $0x30] sm:$0xff]
    %v263 = vld [vmem:[#allocation8 + $0x38] sm:$0xff]
    %v264 = vld [vmem:[#allocation8 + $0x40] sm:$0xff]
    %v265 = vld [vmem:[#allocation8 + $0x48] sm:$0xff]
    %v266 = vld [vmem:[#allocation8 + $0x50] sm:$0xff]
    %v267 = vld [vmem:[#allocation8 + $0x58] sm:$0xff]
    %v268 = vld [vmem:[#allocation8 + $0x60] sm:$0xff]
    %v269 = vld [vmem:[#allocation8 + $0x68] sm:$0xff]
    %v270 = vld [vmem:[#allocation8 + $0x70] sm:$0xff]
    %v271 = vld [vmem:[#allocation8 + $0x78] sm:$0xff]
    %v272 = vld [vmem:[#allocation4] sm:$0xff]
    %v273 = vld [vmem:[#allocation2] sm:$0xff]
    %274 = vmatprep.subr.mxu0 0.0
    %275 = vmatpush1.msra.mxu0 %v256
    %276 = vmatprep.subr.mxu0 0.0
    %277 = vmatpush1.msra.mxu0 %v257
    %278 = vmatprep.subr.mxu0 0.0
    %279 = vmatpush1.msra.mxu0 %v258
    %280 = vmatprep.subr.mxu0 0.0
    %281 = vmatpush1.msra.mxu0 %v259
    %282 = vmatprep.subr.mxu0 0.0
    %283 = vmatpush1.msra.mxu0 %v260
    %284 = vmatprep.subr.mxu0 0.0
    %285 = vmatpush1.msra.mxu0 %v261
    %286 = vmatprep.subr.mxu0 0.0
    %287 = vmatpush1.msra.mxu0 %v262
    %288 = vmatprep.subr.mxu0 0.0
    %289 = vmatpush1.msra.mxu0 %v263
    %290 = vmatprep.subr.mxu0 0.0
    %291 = vmatpush1.msra.mxu0 %v264
    %292 = vmatprep.subr.mxu0 0.0
    %293 = vmatpush1.msra.mxu0 %v265
    %294 = vmatprep.subr.mxu0 0.0
    %295 = vmatpush1.msra.mxu0 %v266
    %296 = vmatprep.subr.mxu0 0.0
    %297 = vmatpush1.msra.mxu0 %v267
    %298 = vmatprep.subr.mxu0 0.0
    %299 = vmatpush1.msra.mxu0 %v268
    %300 = vmatprep.subr.mxu0 0.0
    %301 = vmatpush1.msra.mxu0 %v269
    %302 = vmatprep.subr.mxu0 0.0
    %303 = vmatpush1.msra.mxu0 %v270
    %304 = vmatprep.subr.mxu0 0.0
    %305 = vmatpush1.msra.mxu0 %v271
    %306 = vmatprep.subr.mxu0 0.0
    %307 = vmatpush1.msra.mxu0 0.0
    %308 = vmatprep.subr.mxu0 0.0
    %309 = vmatpush1.msra.mxu0 0.0
    %310 = vmatprep.subr.mxu0 0.0
    %311 = vmatpush1.msra.mxu0 0.0
    %312 = vmatprep.subr.mxu0 0.0
    %313 = vmatpush1.msra.mxu0 0.0
    %314 = vmatprep.subr.mxu0 0.0
    %315 = vmatpush1.msra.mxu0 0.0
    %316 = vmatprep.subr.mxu0 0.0
    %317 = vmatpush1.msra.mxu0 0.0
    %318 = vmatprep.subr.mxu0 0.0
    %319 = vmatpush1.msra.mxu0 0.0
    %320 = vmatprep.subr.mxu0 0.0
    %321 = vmatpush1.msra.mxu0 0.0
    %322 = vmatprep.subr.mxu0 0.0
    %323 = vmatpush1.msra.mxu0 0.0
    %324 = vmatprep.subr.mxu0 0.0
    %325 = vmatpush1.msra.mxu0 0.0
    %326 = vmatprep.subr.mxu0 0.0
    %327 = vmatpush1.msra.mxu0 0.0
    %328 = vmatprep.subr.mxu0 0.0
    %329 = vmatpush1.msra.mxu0 0.0
    %330 = vmatprep.subr.mxu0 0.0
    %331 = vmatpush1.msra.mxu0 0.0
    %332 = vmatprep.subr.mxu0 0.0
    %333 = vmatpush1.msra.mxu0 0.0
    %334 = vmatprep.subr.mxu0 0.0
    %335 = vmatpush1.msra.mxu0 0.0
    %336 = vmatprep.subr.mxu0 0.0
    %337 = vmatpush1.msra.mxu0 0.0
    %338 = vmatprep.mubr.f32.mxu0 0.0
    %339 = vmatmul.mubr.f32.gmra.mrb[0].mxu0 %v272
    %v340 = vpop.f32.mrb[0].mxu0
    %v341 = vadd.f32 0.0, %v340
    %v342 = vpop.f32.mrb[0].mxu0
    %343 = vdwg.mxu0
    %v344 = vadd.f32 %v273, %v341
    %v345 = vtanh.pop %v344
    %346 = vst [vmem:[#allocation3] sm:$0xff] %v345
    %s347 = scalar_lea.vmem [#allocation2], 8
    %v348 = vld [vmem:[%s347] sm:$0xff]
    %349 = vmatprep.subr.mxu0 0.0
    %350 = vmatpush1.msra.mxu0 %v256
    %351 = vmatprep.subr.mxu0 0.0
    %352 = vmatpush1.msra.mxu0 %v257
    %353 = vmatprep.subr.mxu0 0.0
    %354 = vmatpush1.msra.mxu0 %v258
    %355 = vmatprep.subr.mxu0 0.0
    %356 = vmatpush1.msra.mxu0 %v259
    %357 = vmatprep.subr.mxu0 0.0
    %358 = vmatpush1.msra.mxu0 %v260
    %359 = vmatprep.subr.mxu0 0.0
    %360 = vmatpush1.msra.mxu0 %v261
    %361 = vmatprep.subr.mxu0 0.0
    %362 = vmatpush1.msra.mxu0 %v262
    %363 = vmatprep.subr.mxu0 0.0
    %364 = vmatpush1.msra.mxu0 %v263
    %365 = vmatprep.subr.mxu0 0.0
    %366 = vmatpush1.msra.mxu0 %v264
    %367 = vmatprep.subr.mxu0 0.0
    %368 = vmatpush1.msra.mxu0 %v265
    %369 = vmatprep.subr.mxu0 0.0
    %370 = vmatpush1.msra.mxu0 %v266
    %371 = vmatprep.subr.mxu0 0.0
    %372 = vmatpush1.msra.mxu0 %v267
    %373 = vmatprep.subr.mxu0 0.0
    %374 = vmatpush1.msra.mxu0 %v268
    %375 = vmatprep.subr.mxu0 0.0
    %376 = vmatpush1.msra.mxu0 %v269
    %377 = vmatprep.subr.mxu0 0.0
    %378 = vmatpush1.msra.mxu0 %v270
    %379 = vmatprep.subr.mxu0 0.0
    %380 = vmatpush1.msra.mxu0 %v271
    %381 = vmatprep.subr.mxu0 0.0
    %382 = vmatpush1.msra.mxu0 0.0
    %383 = vmatprep.subr.mxu0 0.0
    %384 = vmatpush1.msra.mxu0 0.0
    %385 = vmatprep.subr.mxu0 0.0
    %386 = vmatpush1.msra.mxu0 0.0
    %387 = vmatprep.subr.mxu0 0.0
    %388 = vmatpush1.msra.mxu0 0.0
    %389 = vmatprep.subr.mxu0 0.0
    %390 = vmatpush1.msra.mxu0 0.0
    %391 = vmatprep.subr.mxu0 0.0
    %392 = vmatpush1.msra.mxu0 0.0
    %393 = vmatprep.subr.mxu0 0.0
    %394 = vmatpush1.msra.mxu0 0.0
    %395 = vmatprep.subr.mxu0 0.0
    %396 = vmatpush1.msra.mxu0 0.0
    %397 = vmatprep.subr.mxu0 0.0
    %398 = vmatpush1.msra.mxu0 0.0
    %399 = vmatprep.subr.mxu0 0.0
    %400 = vmatpush1.msra.mxu0 0.0
    %401 = vmatprep.subr.mxu0 0.0
    %402 = vmatpush1.msra.mxu0 0.0
    %403 = vmatprep.subr.mxu0 0.0
    %404 = vmatpush1.msra.mxu0 0.0
    %405 = vmatprep.subr.mxu0 0.0
    %406 = vmatpush1.msra.mxu0 0.0
    %407 = vmatprep.subr.mxu0 0.0
    %408 = vmatpush1.msra.mxu0 0.0
    %409 = vmatprep.subr.mxu0 0.0
    %410 = vmatpush1.msra.mxu0 0.0
    %411 = vmatprep.subr.mxu0 0.0
    %412 = vmatpush1.msra.mxu0 0.0
    %413 = vmatprep.mubr.f32.mxu0 0.0
    %414 = vmatmul.mubr.f32.gmra.mrb[0].mxu0 %v345
    %v415 = vpop.f32.mrb[0].mxu0
    %v416 = vadd.f32 0.0, %v415
    %v417 = vpop.f32.mrb[0].mxu0
    %418 = vdwg.mxu0
    %v419 = vadd.f32 %v348, %v416
    %v420 = vtanh.pop %v419
    %s421 = scalar_lea.vmem [#allocation3], 8
    %422 = vst [vmem:[%s421] sm:$0xff] %v420
    %s423 = scalar_lea.vmem [#allocation2], 16
    %v424 = vld [vmem:[%s423] sm:$0xff]
    %425 = vmatprep.subr.mxu0 0.0
    %426 = vmatpush1.msra.mxu0 %v256
    %427 = vmatprep.subr.mxu0 0.0
    %428 = vmatpush1.msra.mxu0 %v257
    %429 = vmatprep.subr.mxu0 0.0
    %430 = vmatpush1.msra.mxu0 %v258
    %431 = vmatprep.subr.mxu0 0.0
    %432 = vmatpush1.msra.mxu0 %v259
    %433 = vmatprep.subr.mxu0 0.0
    %434 = vmatpush1.msra.mxu0 %v260
    %435 = vmatprep.subr.mxu0 0.0
    %436 = vmatpush1.msra.mxu0 %v261
    %437 = vmatprep.subr.mxu0 0.0
    %438 = vmatpush1.msra.mxu0 %v262
    %439 = vmatprep.subr.mxu0 0.0
    %440 = vmatpush1.msra.mxu0 %v263
    %441 = vmatprep.subr.mxu0 0.0
    %442 = vmatpush1.msra.mxu0 %v264
    %443 = vmatprep.subr.mxu0 0.0
    %444 = vmatpush1.msra.mxu0 %v265
    %445 = vmatprep.subr.mxu0 0.0
    %446 = vmatpush1.msra.mxu0 %v266
    %447 = vmatprep.subr.mxu0 0.0
    %448 = vmatpush1.msra.mxu0 %v267
    %449 = vmatprep.subr.mxu0 0.0
    %450 = vmatpush1.msra.mxu0 %v268
    %451 = vmatprep.subr.mxu0 0.0
    %452 = vmatpush1.msra.mxu0 %v269
    %453 = vmatprep.subr.mxu0 0.0
    %454 = vmatpush1.msra.mxu0 %v270
    %455 = vmatprep.subr.mxu0 0.0
    %456 = vmatpush1.msra.mxu0 %v271
    %457 = vmatprep.subr.mxu0 0.0
    %458 = vmatpush1.msra.mxu0 0.0
    %459 = vmatprep.subr.mxu0 0.0
    %460 = vmatpush1.msra.mxu0 0.0
    %461 = vmatprep.subr.mxu0 0.0
    %462 = vmatpush1.msra.mxu0 0.0
    %463 = vmatprep.subr.mxu0 0.0
    %464 = vmatpush1.msra.mxu0 0.0
    %465 = vmatprep.subr.mxu0 0.0
    %466 = vmatpush1.msra.mxu0 0.0
    %467 = vmatprep.subr.mxu0 0.0
    %468 = vmatpush1.msra.mxu0 0.0
    %469 = vmatprep.subr.mxu0 0.0
    %470 = vmatpush1.msra.mxu0 0.0
    %471 = vmatprep.subr.mxu0 0.0
    %472 = vmatpush1.msra.mxu0 0.0
    %473 = vmatprep.subr.mxu0 0.0
    %474 = vmatpush1.msra.mxu0 0.0
    %475 = vmatprep.subr.mxu0 0.0
    %476 = vmatpush1.msra.mxu0 0.0
    %477 = vmatprep.subr.mxu0 0.0
    %478 = vmatpush1.msra.mxu0 0.0
    %479 = vmatprep.subr.mxu0 0.0
    %480 = vmatpush1.msra.mxu0 0.0
    %481 = vmatprep.subr.mxu0 0.0
    %482 = vmatpush1.msra.mxu0 0.0
    %483 = vmatprep.subr.mxu0 0.0
    %484 = vmatpush1.msra.mxu0 0.0
    %485 = vmatprep.subr.mxu0 0.0
    %486 = vmatpush1.msra.mxu0 0.0
    %487 = vmatprep.subr.mxu0 0.0
    %488 = vmatpush1.msra.mxu0 0.0
    %489 = vmatprep.mubr.f32.mxu0 0.0
    %490 = vmatmul.mubr.f32.gmra.mrb[0].mxu0 %v420
    %v491 = vpop.f32.mrb[0].mxu0
    %v492 = vadd.f32 0.0, %v491
    %v493 = vpop.f32.mrb[0].mxu0
    %494 = vdwg.mxu0
    %v495 = vadd.f32 %v424, %v492
    %v496 = vtanh.pop %v495
    %s497 = scalar_lea.vmem [#allocation3], 16
    %498 = vst [vmem:[%s497] sm:$0xff] %v496
    %s499 = scalar_lea.vmem [#allocation2], 24
    %v500 = vld [vmem:[%s499] sm:$0xff]
    %501 = vmatprep.subr.mxu0 0.0
    %502 = vmatpush1.msra.mxu0 %v256
    %503 = vmatprep.subr.mxu0 0.0
    %504 = vmatpush1.msra.mxu0 %v257
    %505 = vmatprep.subr.mxu0 0.0
    %506 = vmatpush1.msra.mxu0 %v258
    %507 = vmatprep.subr.mxu0 0.0
    %508 = vmatpush1.msra.mxu0 %v259
    %509 = vmatprep.subr.mxu0 0.0
    %510 = vmatpush1.msra.mxu0 %v260
    %511 = vmatprep.subr.mxu0 0.0
    %512 = vmatpush1.msra.mxu0 %v261
    %513 = vmatprep.subr.mxu0 0.0
    %514 = vmatpush1.msra.mxu0 %v262
    %515 = vmatprep.subr.mxu0 0.0
    %516 = vmatpush1.msra.mxu0 %v263
    %517 = vmatprep.subr.mxu0 0.0
    %518 = vmatpush1.msra.mxu0 %v264
    %519 = vmatprep.subr.mxu0 0.0
    %520 = vmatpush1.msra.mxu0 %v265
    %521 = vmatprep.subr.mxu0 0.0
    %522 = vmatpush1.msra.mxu0 %v266
    %523 = vmatprep.subr.mxu0 0.0
    %524 = vmatpush1.msra.mxu0 %v267
    %525 = vmatprep.subr.mxu0 0.0
    %526 = vmatpush1.msra.mxu0 %v268
    %527 = vmatprep.subr.mxu0 0.0
    %528 = vmatpush1.msra.mxu0 %v269
    %529 = vmatprep.subr.mxu0 0.0
    %530 = vmatpush1.msra.mxu0 %v270
    %531 = vmatprep.subr.mxu0 0.0
    %532 = vmatpush1.msra.mxu0 %v271
    %533 = vmatprep.subr.mxu0 0.0
    %534 = vmatpush1.msra.mxu0 0.0
    %535 = vmatprep.subr.mxu0 0.0
    %536 = vmatpush1.msra.mxu0 0.0
    %537 = vmatprep.subr.mxu0 0.0
    %538 = vmatpush1.msra.mxu0 0.0
    %539 = vmatprep.subr.mxu0 0.0
    %540 = vmatpush1.msra.mxu0 0.0
    %541 = vmatprep.subr.mxu0 0.0
    %542 = vmatpush1.msra.mxu0 0.0
    %543 = vmatprep.subr.mxu0 0.0
    %544 = vmatpush1.msra.mxu0 0.0
    %545 = vmatprep.subr.mxu0 0.0
    %546 = vmatpush1.msra.mxu0 0.0
    %547 = vmatprep.subr.mxu0 0.0
    %548 = vmatpush1.msra.mxu0 0.0
    %549 = vmatprep.subr.mxu0 0.0
    %550 = vmatpush1.msra.mxu0 0.0
    %551 = vmatprep.subr.mxu0 0.0
    %552 = vmatpush1.msra.mxu0 0.0
    %553 = vmatprep.subr.mxu0 0.0
    %554 = vmatpush1.msra.mxu0 0.0
    %555 = vmatprep.subr.mxu0 0.0
    %556 = vmatpush1.msra.mxu0 0.0
    %557 = vmatprep.subr.mxu0 0.0
    %558 = vmatpush1.msra.mxu0 0.0
    %559 = vmatprep.subr.mxu0 0.0
    %560 = vmatpush1.msra.mxu0 0.0
    %561 = vmatprep.subr.mxu0 0.0
    %562 = vmatpush1.msra.mxu0 0.0
    %563 = vmatprep.subr.mxu0 0.0
    %564 = vmatpush1.msra.mxu0 0.0
    %565 = vmatprep.mubr.f32.mxu0 0.0
    %566 = vmatmul.mubr.f32.gmra.mrb[0].mxu0 %v496
    %v567 = vpop.f32.mrb[0].mxu0
    %v568 = vadd.f32 0.0, %v567
    %v569 = vpop.f32.mrb[0].mxu0
    %570 = vdwg.mxu0
    %v571 = vadd.f32 %v500, %v568
    %v572 = vtanh.pop %v571
    %s573 = scalar_lea.vmem [#allocation3], 24
    %574 = vst [vmem:[%s573] sm:$0xff] %v572
    %s575 = scalar_lea.vmem [#allocation2], 32
    %v576 = vld [vmem:[%s575] sm:$0xff]
    %577 = vmatprep.subr.mxu0 0.0
    %578 = vmatpush1.msra.mxu0 %v256
    %579 = vmatprep.subr.mxu0 0.0
    %580 = vmatpush1.msra.mxu0 %v257
    %581 = vmatprep.subr.mxu0 0.0
    %582 = vmatpush1.msra.mxu0 %v258
    %583 = vmatprep.subr.mxu0 0.0
    %584 = vmatpush1.msra.mxu0 %v259
    %585 = vmatprep.subr.mxu0 0.0
    %586 = vmatpush1.msra.mxu0 %v260
    %587 = vmatprep.subr.mxu0 0.0
    %588 = vmatpush1.msra.mxu0 %v261
    %589 = vmatprep.subr.mxu0 0.0
    %590 = vmatpush1.msra.mxu0 %v262
    %591 = vmatprep.subr.mxu0 0.0
    %592 = vmatpush1.msra.mxu0 %v263
    %593 = vmatprep.subr.mxu0 0.0
    %594 = vmatpush1.msra.mxu0 %v264
    %595 = vmatprep.subr.mxu0 0.0
    %596 = vmatpush1.msra.mxu0 %v265
    %597 = vmatprep.subr.mxu0 0.0
    %598 = vmatpush1.msra.mxu0 %v266
    %599 = vmatprep.subr.mxu0 0.0
    %600 = vmatpush1.msra.mxu0 %v267
    %601 = vmatprep.subr.mxu0 0.0
    %602 = vmatpush1.msra.mxu0 %v268
    %603 = vmatprep.subr.mxu0 0.0
    %604 = vmatpush1.msra.mxu0 %v269
    %605 = vmatprep.subr.mxu0 0.0
    %606 = vmatpush1.msra.mxu0 %v270
    %607 = vmatprep.subr.mxu0 0.0
    %608 = vmatpush1.msra.mxu0 %v271
    %609 = vmatprep.subr.mxu0 0.0
    %610 = vmatpush1.msra.mxu0 0.0
    %611 = vmatprep.subr.mxu0 0.0
    %612 = vmatpush1.msra.mxu0 0.0
    %613 = vmatprep.subr.mxu0 0.0
    %614 = vmatpush1.msra.mxu0 0.0
    %615 = vmatprep.subr.mxu0 0.0
    %616 = vmatpush1.msra.mxu0 0.0
    %617 = vmatprep.subr.mxu0 0.0
    %618 = vmatpush1.msra.mxu0 0.0
    %619 = vmatprep.subr.mxu0 0.0
    %620 = vmatpush1.msra.mxu0 0.0
    %621 = vmatprep.subr.mxu0 0.0
    %622 = vmatpush1.msra.mxu0 0.0
    %623 = vmatprep.subr.mxu0 0.0
    %624 = vmatpush1.msra.mxu0 0.0
    %625 = vmatprep.subr.mxu0 0.0
    %626 = vmatpush1.msra.mxu0 0.0
    %627 = vmatprep.subr.mxu0 0.0
    %628 = vmatpush1.msra.mxu0 0.0
    %629 = vmatprep.subr.mxu0 0.0
    %630 = vmatpush1.msra.mxu0 0.0
    %631 = vmatprep.subr.mxu0 0.0
    %632 = vmatpush1.msra.mxu0 0.0
    %633 = vmatprep.subr.mxu0 0.0
    %634 = vmatpush1.msra.mxu0 0.0
    %635 = vmatprep.subr.mxu0 0.0
    %636 = vmatpush1.msra.mxu0 0.0
    %637 = vmatprep.subr.mxu0 0.0
    %638 = vmatpush1.msra.mxu0 0.0
    %639 = vmatprep.subr.mxu0 0.0
    %640 = vmatpush1.msra.mxu0 0.0
    %641 = vmatprep.mubr.f32.mxu0 0.0
    %642 = vmatmul.mubr.f32.gmra.mrb[0].mxu0 %v572
    %v643 = vpop.f32.mrb[0].mxu0
    %v644 = vadd.f32 0.0, %v643
    %v645 = vpop.f32.mrb[0].mxu0
    %646 = vdwg.mxu0
    %v647 = vadd.f32 %v576, %v644
    %v648 = vtanh.pop %v647
    %s649 = scalar_lea.vmem [#allocation3], 32
    %650 = vst [vmem:[%s649] sm:$0xff] %v648
    %s651 = scalar_lea.vmem [#allocation2], 40
    %v652 = vld [vmem:[%s651] sm:$0xff]
    %653 = vmatprep.subr.mxu0 0.0
    %654 = vmatpush1.msra.mxu0 %v256
    %655 = vmatprep.subr.mxu0 0.0
    %656 = vmatpush1.msra.mxu0 %v257
    %657 = vmatprep.subr.mxu0 0.0
    %658 = vmatpush1.msra.mxu0 %v258
    %659 = vmatprep.subr.mxu0 0.0
    %660 = vmatpush1.msra.mxu0 %v259
    %661 = vmatprep.subr.mxu0 0.0
    %662 = vmatpush1.msra.mxu0 %v260
    %663 = vmatprep.subr.mxu0 0.0
    %664 = vmatpush1.msra.mxu0 %v261
    %665 = vmatprep.subr.mxu0 0.0
    %666 = vmatpush1.msra.mxu0 %v262
    %667 = vmatprep.subr.mxu0 0.0
    %668 = vmatpush1.msra.mxu0 %v263
    %669 = vmatprep.subr.mxu0 0.0
    %670 = vmatpush1.msra.mxu0 %v264
    %671 = vmatprep.subr.mxu0 0.0
    %672 = vmatpush1.msra.mxu0 %v265
    %673 = vmatprep.subr.mxu0 0.0
    %674 = vmatpush1.msra.mxu0 %v266
    %675 = vmatprep.subr.mxu0 0.0
    %676 = vmatpush1.msra.mxu0 %v267
    %677 = vmatprep.subr.mxu0 0.0
    %678 = vmatpush1.msra.mxu0 %v268
    %679 = vmatprep.subr.mxu0 0.0
    %680 = vmatpush1.msra.mxu0 %v269
    %681 = vmatprep.subr.mxu0 0.0
    %682 = vmatpush1.msra.mxu0 %v270
    %683 = vmatprep.subr.mxu0 0.0
    %684 = vmatpush1.msra.mxu0 %v271
    %685 = vmatprep.subr.mxu0 0.0
    %686 = vmatpush1.msra.mxu0 0.0
    %687 = vmatprep.subr.mxu0 0.0
    %688 = vmatpush1.msra.mxu0 0.0
    %689 = vmatprep.subr.mxu0 0.0
    %690 = vmatpush1.msra.mxu0 0.0
    %691 = vmatprep.subr.mxu0 0.0
    %692 = vmatpush1.msra.mxu0 0.0
    %693 = vmatprep.subr.mxu0 0.0
    %694 = vmatpush1.msra.mxu0 0.0
    %695 = vmatprep.subr.mxu0 0.0
    %696 = vmatpush1.msra.mxu0 0.0
    %697 = vmatprep.subr.mxu0 0.0
    %698 = vmatpush1.msra.mxu0 0.0
    %699 = vmatprep.subr.mxu0 0.0
    %700 = vmatpush1.msra.mxu0 0.0
    %701 = vmatprep.subr.mxu0 0.0
    %702 = vmatpush1.msra.mxu0 0.0
    %703 = vmatprep.subr.mxu0 0.0
    %704 = vmatpush1.msra.mxu0 0.0
    %705 = vmatprep.subr.mxu0 0.0
    %706 = vmatpush1.msra.mxu0 0.0
    %707 = vmatprep.subr.mxu0 0.0
    %708 = vmatpush1.msra.mxu0 0.0
    %709 = vmatprep.subr.mxu0 0.0
    %710 = vmatpush1.msra.mxu0 0.0
    %711 = vmatprep.subr.mxu0 0.0
    %712 = vmatpush1.msra.mxu0 0.0
    %713 = vmatprep.subr.mxu0 0.0
    %714 = vmatpush1.msra.mxu0 0.0
    %715 = vmatprep.subr.mxu0 0.0
    %716 = vmatpush1.msra.mxu0 0.0
    %717 = vmatprep.mubr.f32.mxu0 0.0
    %718 = vmatmul.mubr.f32.gmra.mrb[0].mxu0 %v648
    %v719 = vpop.f32.mrb[0].mxu0
    %v720 = vadd.f32 0.0, %v719
    %v721 = vpop.f32.mrb[0].mxu0
    %722 = vdwg.mxu0
    %v723 = vadd.f32 %v652, %v720
    %v724 = vtanh.pop %v723
    %s725 = scalar_lea.vmem [#allocation3], 40
    %726 = vst [vmem:[%s725] sm:$0xff] %v724
    %s727 = scalar_lea.vmem [#allocation2], 48
    %v728 = vld [vmem:[%s727] sm:$0xff]
    %729 = vmatprep.subr.mxu0 0.0
    %730 = vmatpush1.msra.mxu0 %v256
    %731 = vmatprep.subr.mxu0 0.0
    %732 = vmatpush1.msra.mxu0 %v257
    %733 = vmatprep.subr.mxu0 0.0
    %734 = vmatpush1.msra.mxu0 %v258
    %735 = vmatprep.subr.mxu0 0.0
    %736 = vmatpush1.msra.mxu0 %v259
    %737 = vmatprep.subr.mxu0 0.0
    %738 = vmatpush1.msra.mxu0 %v260
    %739 = vmatprep.subr.mxu0 0.0
    %740 = vmatpush1.msra.mxu0 %v261
    %741 = vmatprep.subr.mxu0 0.0
    %742 = vmatpush1.msra.mxu0 %v262
    %743 = vmatprep.subr.mxu0 0.0
    %744 = vmatpush1.msra.mxu0 %v263
    %745 = vmatprep.subr.mxu0 0.0
    %746 = vmatpush1.msra.mxu0 %v264
    %747 = vmatprep.subr.mxu0 0.0
    %748 = vmatpush1.msra.mxu0 %v265
    %749 = vmatprep.subr.mxu0 0.0
    %750 = vmatpush1.msra.mxu0 %v266
    %751 = vmatprep.subr.mxu0 0.0
    %752 = vmatpush1.msra.mxu0 %v267
    %753 = vmatprep.subr.mxu0 0.0
    %754 = vmatpush1.msra.mxu0 %v268
    %755 = vmatprep.subr.mxu0 0.0
    %756 = vmatpush1.msra.mxu0 %v269
    %757 = vmatprep.subr.mxu0 0.0
    %758 = vmatpush1.msra.mxu0 %v270
    %759 = vmatprep.subr.mxu0 0.0
    %760 = vmatpush1.msra.mxu0 %v271
    %761 = vmatprep.subr.mxu0 0.0
    %762 = vmatpush1.msra.mxu0 0.0
    %763 = vmatprep.subr.mxu0 0.0
    %764 = vmatpush1.msra.mxu0 0.0
    %765 = vmatprep.subr.mxu0 0.0
    %766 = vmatpush1.msra.mxu0 0.0
    %767 = vmatprep.subr.mxu0 0.0
    %768 = vmatpush1.msra.mxu0 0.0
    %769 = vmatprep.subr.mxu0 0.0
    %770 = vmatpush1.msra.mxu0 0.0
    %771 = vmatprep.subr.mxu0 0.0
    %772 = vmatpush1.msra.mxu0 0.0
    %773 = vmatprep.subr.mxu0 0.0
    %774 = vmatpush1.msra.mxu0 0.0
    %775 = vmatprep.subr.mxu0 0.0
    %776 = vmatpush1.msra.mxu0 0.0
    %777 = vmatprep.subr.mxu0 0.0
    %778 = vmatpush1.msra.mxu0 0.0
    %779 = vmatprep.subr.mxu0 0.0
    %780 = vmatpush1.msra.mxu0 0.0
    %781 = vmatprep.subr.mxu0 0.0
    %782 = vmatpush1.msra.mxu0 0.0
    %783 = vmatprep.subr.mxu0 0.0
    %784 = vmatpush1.msra.mxu0 0.0
    %785 = vmatprep.subr.mxu0 0.0
    %786 = vmatpush1.msra.mxu0 0.0
    %787 = vmatprep.subr.mxu0 0.0
    %788 = vmatpush1.msra.mxu0 0.0
    %789 = vmatprep.subr.mxu0 0.0
    %790 = vmatpush1.msra.mxu0 0.0
    %791 = vmatprep.subr.mxu0 0.0
    %792 = vmatpush1.msra.mxu0 0.0
    %793 = vmatprep.mubr.f32.mxu0 0.0
    %794 = vmatmul.mubr.f32.gmra.mrb[0].mxu0 %v724
    %v795 = vpop.f32.mrb[0].mxu0
    %v796 = vadd.f32 0.0, %v795
    %v797 = vpop.f32.mrb[0].mxu0
    %798 = vdwg.mxu0
    %v799 = vadd.f32 %v728, %v796
    %v800 = vtanh.pop %v799
    %s801 = scalar_lea.vmem [#allocation3], 48
    %802 = vst [vmem:[%s801] sm:$0xff] %v800
    %s803 = scalar_lea.vmem [#allocation2], 56
    %v804 = vld [vmem:[%s803] sm:$0xff]
    %805 = vmatprep.subr.mxu0 0.0
    %806 = vmatpush1.msra.mxu0 %v256
    %807 = vmatprep.subr.mxu0 0.0
    %808 = vmatpush1.msra.mxu0 %v257
    %809 = vmatprep.subr.mxu0 0.0
    %810 = vmatpush1.msra.mxu0 %v258
    %811 = vmatprep.subr.mxu0 0.0
    %812 = vmatpush1.msra.mxu0 %v259
    %813 = vmatprep.subr.mxu0 0.0
    %814 = vmatpush1.msra.mxu0 %v260
    %815 = vmatprep.subr.mxu0 0.0
    %816 = vmatpush1.msra.mxu0 %v261
    %817 = vmatprep.subr.mxu0 0.0
    %818 = vmatpush1.msra.mxu0 %v262
    %819 = vmatprep.subr.mxu0 0.0
    %820 = vmatpush1.msra.mxu0 %v263
    %821 = vmatprep.subr.mxu0 0.0
    %822 = vmatpush1.msra.mxu0 %v264
    %823 = vmatprep.subr.mxu0 0.0
    %824 = vmatpush1.msra.mxu0 %v265
    %825 = vmatprep.subr.mxu0 0.0
    %826 = vmatpush1.msra.mxu0 %v266
    %827 = vmatprep.subr.mxu0 0.0
    %828 = vmatpush1.msra.mxu0 %v267
    %829 = vmatprep.subr.mxu0 0.0
    %830 = vmatpush1.msra.mxu0 %v268
    %831 = vmatprep.subr.mxu0 0.0
    %832 = vmatpush1.msra.mxu0 %v269
    %833 = vmatprep.subr.mxu0 0.0
    %834 = vmatpush1.msra.mxu0 %v270
    %835 = vmatprep.subr.mxu0 0.0
    %836 = vmatpush1.msra.mxu0 %v271
    %837 = vmatprep.subr.mxu0 0.0
    %838 = vmatpush1.msra.mxu0 0.0
    %839 = vmatprep.subr.mxu0 0.0
    %840 = vmatpush1.msra.mxu0 0.0
    %841 = vmatprep.subr.mxu0 0.0
    %842 = vmatpush1.msra.mxu0 0.0
    %843 = vmatprep.subr.mxu0 0.0
    %844 = vmatpush1.msra.mxu0 0.0
    %845 = vmatprep.subr.mxu0 0.0
    %846 = vmatpush1.msra.mxu0 0.0
    %847 = vmatprep.subr.mxu0 0.0
    %848 = vmatpush1.msra.mxu0 0.0
    %849 = vmatprep.subr.mxu0 0.0
    %850 = vmatpush1.msra.mxu0 0.0
    %851 = vmatprep.subr.mxu0 0.0
    %852 = vmatpush1.msra.mxu0 0.0
    %853 = vmatprep.subr.mxu0 0.0
    %854 = vmatpush1.msra.mxu0 0.0
    %855 = vmatprep.subr.mxu0 0.0
    %856 = vmatpush1.msra.mxu0 0.0
    %857 = vmatprep.subr.mxu0 0.0
    %858 = vmatpush1.msra.mxu0 0.0
    %859 = vmatprep.subr.mxu0 0.0
    %860 = vmatpush1.msra.mxu0 0.0
    %861 = vmatprep.subr.mxu0 0.0
    %862 = vmatpush1.msra.mxu0 0.0
    %863 = vmatprep.subr.mxu0 0.0
    %864 = vmatpush1.msra.mxu0 0.0
    %865 = vmatprep.subr.mxu0 0.0
    %866 = vmatpush1.msra.mxu0 0.0
    %867 = vmatprep.subr.mxu0 0.0
    %868 = vmatpush1.msra.mxu0 0.0
    %869 = vmatprep.mubr.f32.mxu0 0.0
    %870 = vmatmul.mubr.f32.gmra.mrb[0].mxu0 %v800
    %v871 = vpop.f32.mrb[0].mxu0
    %v872 = vadd.f32 0.0, %v871
    %v873 = vpop.f32.mrb[0].mxu0
    %874 = vdwg.mxu0
    %v875 = vadd.f32 %v804, %v872
    %v876 = vtanh.pop %v875
    %s877 = scalar_lea.vmem [#allocation3], 56
    %878 = vst [vmem:[%s877] sm:$0xff] %v876
    %879 = vst [vmem:[#allocation4] sm:$0xff] %v876
    %v880 = vld [vmem:[#allocation3] sm:$0xff]
    %v881 = vld [vmem:[#allocation3 + $0x8] sm:$0xff]
    %v882 = vld [vmem:[#allocation3 + $0x10] sm:$0xff]
    %v883 = vld [vmem:[#allocation3 + $0x18] sm:$0xff]
    %v884 = vld [vmem:[#allocation3 + $0x20] sm:$0xff]
    %v885 = vld [vmem:[#allocation3 + $0x28] sm:$0xff]
    %v886 = vld [vmem:[#allocation3 + $0x30] sm:$0xff]
    %v887 = vld [vmem:[#allocation3 + $0x38] sm:$0xff]
    %v888 = vld [vmem:[#allocation10] sm:$0xff]
    %v889 = vld [vmem:[#allocation10 + $0x8] sm:$0xff]
    %v890 = vld [vmem:[#allocation10 + $0x10] sm:$0xff]
    %v891 = vld [vmem:[#allocation10 + $0x18] sm:$0xff]
    %v892 = vld [vmem:[#allocation10 + $0x20] sm:$0xff]
    %v893 = vld [vmem:[#allocation10 + $0x28] sm:$0xff]
    %v894 = vld [vmem:[#allocation10 + $0x30] sm:$0xff]
    %v895 = vld [vmem:[#allocation10 + $0x38] sm:$0xff]
    %v896 = vld [vmem:[#allocation10 + $0x40] sm:$0xff]
    %v897 = vld [vmem:[#allocation10 + $0x48] sm:$0xff]
    %v898 = vld [vmem:[#allocation10 + $0x50] sm:$0xff]
    %v899 = vld [vmem:[#allocation10 + $0x58] sm:$0xff]
    %v900 = vld [vmem:[#allocation10 + $0x60] sm:$0xff]
    %v901 = vld [vmem:[#allocation10 + $0x68] sm:$0xff]
    %v902 = vld [vmem:[#allocation10 + $0x70] sm:$0xff]
    %v903 = vld [vmem:[#allocation10 + $0x78] sm:$0xff]
    %v904 = vld [vmem:[%s5] sm:$0x1]
    %v906 = vlaneseq
    %v907 = vshrl.u32 %v906, 7
    %v908 = vsub.s32 0, %v907
    %v909 = vrot.slane %v904, %v908
    %911 = vmatprep.subr.mxu0 0.0
    %912 = vmatpush1.msra.mxu0 %v888
    %913 = vmatprep.subr.mxu0 0.0
    %914 = vmatpush1.msra.mxu0 %v889
    %915 = vmatprep.subr.mxu0 0.0
    %916 = vmatpush1.msra.mxu0 %v890
    %917 = vmatprep.subr.mxu0 0.0
    %918 = vmatpush1.msra.mxu0 %v891
    %919 = vmatprep.subr.mxu0 0.0
    %920 = vmatpush1.msra.mxu0 %v892
    %921 = vmatprep.subr.mxu0 0.0
    %922 = vmatpush1.msra.mxu0 %v893
    %923 = vmatprep.subr.mxu0 0.0
    %924 = vmatpush1.msra.mxu0 %v894
    %925 = vmatprep.subr.mxu0 0.0
    %926 = vmatpush1.msra.mxu0 %v895
    %927 = vmatprep.subr.mxu0 0.0
    %928 = vmatpush1.msra.mxu0 %v896
    %929 = vmatprep.subr.mxu0 0.0
    %930 = vmatpush1.msra.mxu0 %v897
    %931 = vmatprep.subr.mxu0 0.0
    %932 = vmatpush1.msra.mxu0 %v898
    %933 = vmatprep.subr.mxu0 0.0
    %934 = vmatpush1.msra.mxu0 %v899
    %935 = vmatprep.subr.mxu0 0.0
    %936 = vmatpush1.msra.mxu0 %v900
    %937 = vmatprep.subr.mxu0 0.0
    %938 = vmatpush1.msra.mxu0 %v901
    %939 = vmatprep.subr.mxu0 0.0
    %940 = vmatpush1.msra.mxu0 %v902
    %941 = vmatprep.subr.mxu0 0.0
    %942 = vmatpush1.msra.mxu0 %v903
    %943 = vmatprep.subr.mxu0 0.0
    %944 = vmatpush1.msra.mxu0 0.0
    %945 = vmatprep.subr.mxu0 0.0
    %946 = vmatpush1.msra.mxu0 0.0
    %947 = vmatprep.subr.mxu0 0.0
    %948 = vmatpush1.msra.mxu0 0.0
    %949 = vmatprep.subr.mxu0 0.0
    %950 = vmatpush1.msra.mxu0 0.0
    %951 = vmatprep.subr.mxu0 0.0
    %952 = vmatpush1.msra.mxu0 0.0
    %953 = vmatprep.subr.mxu0 0.0
    %954 = vmatpush1.msra.mxu0 0.0
    %955 = vmatprep.subr.mxu0 0.0
    %956 = vmatpush1.msra.mxu0 0.0
    %957 = vmatprep.subr.mxu0 0.0
    %958 = vmatpush1.msra.mxu0 0.0
    %959 = vmatprep.subr.mxu0 0.0
    %960 = vmatpush1.msra.mxu0 0.0
    %961 = vmatprep.subr.mxu0 0.0
    %962 = vmatpush1.msra.mxu0 0.0
    %963 = vmatprep.subr.mxu0 0.0
    %964 = vmatpush1.msra.mxu0 0.0
    %965 = vmatprep.subr.mxu0 0.0
    %966 = vmatpush1.msra.mxu0 0.0
    %967 = vmatprep.subr.mxu0 0.0
    %968 = vmatpush1.msra.mxu0 0.0
    %969 = vmatprep.subr.mxu0 0.0
    %970 = vmatpush1.msra.mxu0 0.0
    %971 = vmatprep.subr.mxu0 0.0
    %972 = vmatpush1.msra.mxu0 0.0
    %973 = vmatprep.subr.mxu0 0.0
    %974 = vmatpush1.msra.mxu0 0.0
    %975 = vmatprep.mubr.f32.mxu0 0.0
    %976 = vmatmul.mubr.f32.gmra.mrb[0].mxu0 %v880
    %v977 = vpop.f32.mrb[0].mxu0
    %v978 = vadd.f32 %v909, %v977
    %v979 = vpop.f32.mrb[0].mxu0
    %980 = vmatprep.mubr.f32.mxu0 0.0
    %981 = vmatmul.mubr.f32.gmra.mrb[0].mxu0 %v881
    %v982 = vpop.f32.mrb[0].mxu0
    %v983 = vadd.f32 %v909, %v982
    %v984 = vpop.f32.mrb[0].mxu0
    %985 = vmatprep.mubr.f32.mxu0 0.0
    %986 = vmatmul.mubr.f32.gmra.mrb[0].mxu0 %v882
    %v987 = vpop.f32.mrb[0].mxu0
    %v988 = vadd.f32 %v909, %v987
    %v989 = vpop.f32.mrb[0].mxu0
    %990 = vmatprep.mubr.f32.mxu0 0.0
    %991 = vmatmul.mubr.f32.gmra.mrb[0].mxu0 %v883
    %v992 = vpop.f32.mrb[0].mxu0
    %v993 = vadd.f32 %v909, %v992
    %v994 = vpop.f32.mrb[0].mxu0
    %995 = vmatprep.mubr.f32.mxu0 0.0
    %996 = vmatmul.mubr.f32.gmra.mrb[0].mxu0 %v884
    %v997 = vpop.f32.mrb[0].mxu0
    %v998 = vadd.f32 %v909, %v997
    %v999 = vpop.f32.mrb[0].mxu0
    %1000 = vmatprep.mubr.f32.mxu0 0.0
    %1001 = vmatmul.mubr.f32.gmra.mrb[0].mxu0 %v885
    %v1002 = vpop.f32.mrb[0].mxu0
    %v1003 = vadd.f32 %v909, %v1002
    %v1004 = vpop.f32.mrb[0].mxu0
    %1005 = vmatprep.mubr.f32.mxu0 0.0
    %1006 = vmatmul.mubr.f32.gmra.mrb[0].mxu0 %v886
    %v1007 = vpop.f32.mrb[0].mxu0
    %v1008 = vadd.f32 %v909, %v1007
    %v1009 = vpop.f32.mrb[0].mxu0
    %1010 = vmatprep.mubr.f32.mxu0 0.0
    %1011 = vmatmul.mubr.f32.gmra.mrb[0].mxu0 %v887
    %v1012 = vpop.f32.mrb[0].mxu0
    %v1013 = vadd.f32 %v909, %v1012
    %v1014 = vpop.f32.mrb[0].mxu0
    %1015 = vdwg.mxu0
    %1016 = vst [vmem:[#allocation11] sm:$0xff] %v978
    %1017 = vst [vmem:[#allocation11 + $0x8] sm:$0xff] %v983
    %1018 = vst [vmem:[#allocation11 + $0x10] sm:$0xff] %v988
    %1019 = vst [vmem:[#allocation11 + $0x18] sm:$0xff] %v993
    %1020 = vst [vmem:[#allocation11 + $0x20] sm:$0xff] %v998
    %1021 = vst [vmem:[#allocation11 + $0x28] sm:$0xff] %v1003
    %1022 = vst [vmem:[#allocation11 + $0x30] sm:$0xff] %v1008
    %1023 = vst [vmem:[#allocation11 + $0x38] sm:$0xff] %v1013
    // Predicated region
    $region42: #{tpu_custom_call.1} parent=1 // pred_check
      _
    $region43: #{tpu_custom_call.1} parent=1 // pred_check_branch
      %1025 = sbr.rel (0) target = $region45
    $region44: #{tpu_custom_call.1} parent=1 // pred_region
      %s1027 = ssub.s32 1024, 1024
      %1028 = vsyncadd [#allocation7], %s1027
      %s1029 = sshll.u32 [#allocation11], 4
      %s1030 = int_to_ptr.vmem [resolvable:$true] %s1029
      %1035 = dma.vmem_to_hbm [thread:$0]  %s1030, 1024, %s6, [#allocation7], 128, 128, 8
    $region45: #{tpu_custom_call.1} parent=1 // pred_fallthru
      _
    // Predicated region
    $region46: #{tpu_custom_call.1} parent=1 // pred_check
      _
    $region47: #{tpu_custom_call.1} parent=1 // pred_check_branch
      %1037 = sbr.rel (0) target = $region49
    $region48: #{tpu_custom_call.1} parent=1 // pred_region
      %1038 = dma.done [#allocation7], 1024
    $region49: #{tpu_custom_call.1} parent=1 // pred_fallthru
      _
    %1039 = vsyncpa [#allocation6], 1
    %1040 = vsyncpa [#allocation9], 1
    %1041 = vsyncpa [#allocation7], 1

</llo_original>
